<compile_context>
chip_gen: v7x
topology: tpu7x:2x2x1
jax: 0.10.0
libtpu: 0.0.40
codegen_flags: <defaults>
</compile_context>

<pallas_src>
import jax
import jax.numpy as jnp
from jax.experimental import pallas as pl
from jax.experimental.pallas import tpu as pltpu


def _slice_kernel(x_ref, o_ref):
    # x_ref: (C_blk, H, W) slab for one batch index; o_ref: (C_blk, H-2, 3)
    H = x_ref.shape[1]
    o_ref[...] = x_ref[:, 1:H - 1, 0:3]


def slice_forward(x, *, vmem_budget_bytes=24 * 1024 * 1024):
    """Equivalent of PyTorch: return x[..., 1:-1, 0:3] (NCHW layout)."""
    N, C, H, W = x.shape
    if H < 3 or W < 3:
        raise ValueError("Slice kernel requires H >= 3 and W >= 3")
    Ho, Wo = H - 2, 3
    itemsize = jnp.dtype(x.dtype).itemsize

    # Channel-batched block sizing: double-buffered input slab + output slab
    # per channel must fit the (conservative) scoped-VMEM budget.
    per_c_bytes = 2 * (H * W + Ho * Wo) * itemsize
    c_blk = max(1, min(C, vmem_budget_bytes // max(per_c_bytes, 1)))
    while C % c_blk != 0:   # keep clean tiling of the channel axis
        c_blk -= 1
    grid = (N, C // c_blk)  # >= N parallel steps -> both v7x TCs stay busy

    out_shape = jax.ShapeDtypeStruct((N, C, Ho, Wo), x.dtype)
    bytes_accessed = N * C * (H * W + Ho * Wo) * itemsize

    return pl.pallas_call(
        _slice_kernel,
        out_shape=out_shape,
        grid_spec=pltpu.PrefetchScalarGridSpec(
            num_scalar_prefetch=0,
            grid=grid,
            in_specs=[
                # Full (H, W) trailing dims per block -> (8,128) rule satisfied
                # (block equals the full array dims on the last two axes).
                pl.BlockSpec((pl.Squeezed(), c_blk, H, W),
                             lambda n, cb: (n, cb, 0, 0)),
            ],
            # Output block = full (Ho, Wo) trailing dims, batched over C_blk
            # channels so each write-back DMA is C_blk x larger than before.
            out_specs=pl.BlockSpec((pl.Squeezed(), c_blk, Ho, Wo),
                                   lambda n, cb: (n, cb, 0, 0)),
        ),
        compiler_params=pltpu.CompilerParams(
            dimension_semantics=("parallel", "parallel"),
            vmem_limit_bytes=32 * 1024 * 1024,
        ),
        cost_estimate=pl.CostEstimate(
            flops=0, transcendentals=0, bytes_accessed=bytes_accessed),
    )(x)


if __name__ == "__main__":
    key = jax.random.PRNGKey(0)
    x = jax.random.normal(key, (2, 4, 16, 16), dtype=jnp.float32)

    out = jax.block_until_ready(slice_forward(x))

    # sanity check against plain-JAX reference semantics
    ref = x[..., 1:-1, 0:3]
    assert out.shape == (2, 4, 14, 3), out.shape
    assert jnp.array_equal(out, ref), "mismatch vs reference slice"

    print("KERNEL_OK")
</pallas_src>

<mosaic_0001>
module attributes {stable_mosaic.version = 11 : i64} {
  func.func @_slice_kernel(%arg0: i32, %arg1: i32, %arg2: memref<1x4x16x16xf32, #tpu.memory_space<vmem>>, %arg3: memref<1x4x14x3xf32, #tpu.memory_space<vmem>>) attributes {dimension_semantics = [#tpu.dimension_semantics<parallel>, #tpu.dimension_semantics<parallel>], iteration_bounds = array<i64: 2, 1>, scalar_prefetch = 0 : i64, scratch_operands = 0 : i64, tpu.core_type = #tpu.core_type<tc>, window_params = [{transform_indices = @transform_0, window_bounds = array<i64: 1, 4, 16, 16>}, {transform_indices = @transform_1, window_bounds = array<i64: 1, 4, 14, 3>}]} {
    %c0 = arith.constant 0 : index
    %c0_0 = arith.constant 0 : index
    %c1 = arith.constant 1 : index
    %c0_1 = arith.constant 0 : index
    %0 = vector.load %arg2[%c0, %c0_0, %c1, %c0_1] : memref<1x4x16x16xf32, #tpu.memory_space<vmem>>, vector<1x4x14x3xf32>
    %1 = vector.shape_cast %0 : vector<1x4x14x3xf32> to vector<4x14x3xf32>
    %c0_2 = arith.constant 0 : index
    %c0_3 = arith.constant 0 : index
    %c0_4 = arith.constant 0 : index
    %c0_5 = arith.constant 0 : index
    %2 = vector.load %arg3[%c0_2, %c0_3, %c0_4, %c0_5] : memref<1x4x14x3xf32, #tpu.memory_space<vmem>>, vector<1x4x14x3xf32>
    %3 = vector.shape_cast %2 : vector<1x4x14x3xf32> to vector<4x14x3xf32>
    %4 = vector.shape_cast %1 : vector<4x14x3xf32> to vector<1x4x14x3xf32>
    tpu.vector_store %arg3[%c0_2, %c0_3, %c0_4, %c0_5], %4 {strides = array<i32>} : memref<1x4x14x3xf32, #tpu.memory_space<vmem>>, vector<1x4x14x3xf32>,
    return
  }
  func.func @transform_0(%arg0: i32, %arg1: i32) -> (i32, i32, i32, i32) {
    %c0_i32 = arith.constant 0 : i32
    %c0_i32_0 = arith.constant 0 : i32
    %c0_i32_1 = arith.constant 0 : i32
    return %arg0, %arg1, %c0_i32, %c0_i32_0 : i32, i32, i32, i32
  }
  func.func @transform_1(%arg0: i32, %arg1: i32) -> (i32, i32, i32, i32) {
    %c0_i32 = arith.constant 0 : i32
    %c0_i32_0 = arith.constant 0 : i32
    %c0_i32_1 = arith.constant 0 : i32
    return %arg0, %arg1, %c0_i32, %c0_i32_0 : i32, i32, i32, i32
  }
}

</mosaic_0001>

<llo_original>
// kernel: tpu_custom_call.1
$region0: #{tpu_custom_call.1}
  #allocation0 [shape = 'u32[]', space=smem, size = 0x4, offset = 0x4, fixed_abs, tag = 'smem constant byte address 0x4 - core index']
  #allocation1 [shape = 'u32[144,128]{1,0:T(1,128)}', space=vmem, size = 0x12000, scoped, tag = 'internal scratch']
  %s0 = inlined_call_operand.hbm [shape: f32[2,4,16,16], index: 0, kind: input, shape index: {}]
  %s1 = inlined_call_operand.vmem [shape: f32[2,4,14,3], index: 1, kind: output, shape index: {}]
  %s2 = sld [smem:[#allocation0]]
  $region41: #{tpu_custom_call.1} parent=0
    _
  %s4 = ssub.s32 1, %s2
  %s5 = scalar_select 0, %s4, %s2
  $region1: #{tpu_custom_call.1} parent=0
    #allocation2 [shape = 'u8[65536]{0}', space=vmem, size = 0x10000, scoped, tag = 'input window, operand 0']
    #allocation3 [shape = 's32[2]{0}', space=sflag, size = 0x8, scoped, tag = 'scoped memory for tpu_custom_call.1']
    %6 = vsyncpa [#allocation3], 0
    %s7 = scalar_lea.sflag [#allocation3], 1
    %8 = vsyncpa %s7, 0
    loop: start=0, step=1, limit=4
    $region2: #{tpu_custom_call.1} parent=1 // loop_pre_header
      _
    $region3: #{tpu_custom_call.1} parent=1 // loop_header
      %s10 = sphi 0, %s14
      %p11 = scmp.ge.s32.totalorder %s10, 4
      %s17 = sphi 0, %s29
      %s18 = sphi 0, %s25
      %s19 = sphi 0, %s17
      %s20 = sphi 0, %s18
      %s21 = sphi 0, %s19
      %s22 = sphi 0, %s20
      %s34 = sphi 0, %s36
      %s37 = sphi 0, %s34
      %s38 = sphi 0, %s37
      %s54 = sphi 0, %s38
      %s62 = sphi 0, %s64
      %s65 = sphi 0, %s62
      %s66 = sphi 0, %s65
      %s82 = sphi 0, %s66
    $region4: #{tpu_custom_call.1} parent=1 // loop_header_branch
      %13 = sbr.rel (%p11) target = $region8
    $region5: #{tpu_custom_call.1} parent=1 // loop_body
      %s15 = ssub.s32 %s10, 1
      %s16 = ssub.s32 %s10, 2
      %s23 = sadd.s32 1, %s18
      %p24 = scmp.ge.s32.totalorder %s23, 1
      %s25 = scalar_select %p24, 0, %s23
      %s26 = sadd.s32 1, %s17
      %s27 = scalar_select %p24, %s26, %s17
      %p28 = scmp.ge.s32.totalorder %s27, 2
      %s29 = scalar_select %p28, 0, %s27
      %s30 = ssub.s32 %s17, %s29
      %s31 = ssub.s32 %s18, %s25
      %s32 = sor.u32 %s30, %s31
      %p33 = scmp.eq.s32.totalorder %s32, 0
      %s35 = sadd.s32 %s34, 1
      %s36 = scalar_select %p33, %s34, %s35
      %p39 = pneg %p33
      %p40 = scmp.eq.s32.totalorder %s10, 1
      %p41 = por %p39, %p40
      %p42 = scmp.ne.s32.totalorder %s34, %s37
      %p43 = scmp.eq.s32.totalorder %s10, 0
      %p44 = por %p42, %p43
      %p45 = scmp.ne.s32.totalorder %s34, %s37
      %p46 = scmp.eq.s32.totalorder %s15, 1
      %p47 = por %p45, %p46
      %p48 = scmp.ne.s32.totalorder %s37, %s38
      %p49 = scmp.eq.s32.totalorder %s15, 0
      %p50 = por %p48, %p49
      %p51 = scmp.ne.s32.totalorder %s37, %s38
      %p52 = scmp.eq.s32.totalorder %s16, 1
      %p53 = por %p51, %p52
      %p55 = scmp.ne.s32.totalorder %s38, %s54
      %p56 = scmp.eq.s32.totalorder %s16, 0
      %p57 = por %p55, %p56
      %s58 = ssub.s32 %s17, %s29
      %s59 = ssub.s32 %s18, %s25
      %s60 = sor.u32 %s58, %s59
      %p61 = scmp.eq.s32.totalorder %s60, 0
      %s63 = sadd.s32 %s62, 1
      %s64 = scalar_select %p61, %s62, %s63
      %p67 = pneg %p61
      %p68 = scmp.eq.s32.totalorder %s10, 1
      %p69 = por %p67, %p68
      %p70 = scmp.ne.s32.totalorder %s62, %s65
      %p71 = scmp.eq.s32.totalorder %s10, 0
      %p72 = por %p70, %p71
      %p73 = scmp.ne.s32.totalorder %s62, %s65
      %p74 = scmp.eq.s32.totalorder %s15, 1
      %p75 = por %p73, %p74
      %p76 = scmp.ne.s32.totalorder %s65, %s66
      %p77 = scmp.eq.s32.totalorder %s15, 0
      %p78 = por %p76, %p77
      %p79 = scmp.ne.s32.totalorder %s65, %s66
      %p80 = scmp.eq.s32.totalorder %s16, 1
      %p81 = por %p79, %p80
      %p83 = scmp.ne.s32.totalorder %s66, %s82
      %p84 = scmp.eq.s32.totalorder %s16, 0
      %p85 = por %p83, %p84
      %p86 = scmp.le.s32.totalorder 1, %s10
      %p87 = scmp.lt.s32.totalorder %s10, 3
      %p88 = pnand %p86, %p87
      %p89 = pneg %p88
      // Predicated region
      $region9: #{tpu_custom_call.1} parent=5 // pred_check
        _
      $region10: #{tpu_custom_call.1} parent=5 // pred_check_branch
        %91 = sbr.rel (%p88) target = $region12
      $region11: #{tpu_custom_call.1} parent=5 // pred_region
        %s92 = ssub.s32 %s10, 1
      $region12: #{tpu_custom_call.1} parent=5 // pred_fallthru
        _
      %p93 = scmp.lt.s32.totalorder %s10, 2
      // Predicated region
      $region13: #{tpu_custom_call.1} parent=5 // pred_check
        %p94 = pneg %p93
      $region14: #{tpu_custom_call.1} parent=5 // pred_check_branch
        %96 = sbr.rel (%p94) target = $region16
      $region15: #{tpu_custom_call.1} parent=5 // pred_region
        // Predicated region
        $region17: #{tpu_custom_call.1} parent=15 // pred_check
          %p97 = pneg %p44
        $region18: #{tpu_custom_call.1} parent=15 // pred_check_branch
          %99 = sbr.rel (%p97) target = $region20
        $region19: #{tpu_custom_call.1} parent=15 // pred_region
          %s100 = sand.u32 %s34, 1
          %s101 = scalar_lea.sflag [#allocation3], %s100
          %s102 = sand.u32 %s34, 1
          %s103 = smul.addr %s102, 64
          %s104 = scalar_lea.vmem [#allocation2], %s103
          %s105 = smul.u32 4, %s18
          %s107 = ssub.s32 1024, 1024
          %108 = vsyncadd %s101, %s107
          %s109 = smul.addr %s105, 2
          %s110 = smul.addr %s17, 8
          %s111 = sadd.s32 %s109, %s110
          %s112 = smul.addr %s111, 128
          %s113 = scalar_lea.hbm %s0, %s112
          %s114 = sshll.u32 %s104, 4
          %s115 = int_to_ptr.vmem [resolvable:$true] %s114
          %120 = dma.hbm_to_vmem [thread:$0]  %s113, 1024, %s115, %s101, 128, 128, 8
        $region20: #{tpu_custom_call.1} parent=15 // pred_fallthru
          _
      $region16: #{tpu_custom_call.1} parent=5 // pred_fallthru
        _
      %p121 = scmp.le.s32.totalorder 1, %s10
      %p122 = scmp.lt.s32.totalorder %s10, 3
      %p123 = pnand %p121, %p122
      %p124 = pneg %p123
      // Predicated region
      $region21: #{tpu_custom_call.1} parent=5 // pred_check
        _
      $region22: #{tpu_custom_call.1} parent=5 // pred_check_branch
        %126 = sbr.rel (%p123) target = $region24
      $region23: #{tpu_custom_call.1} parent=5 // pred_region
        %s127 = ssub.s32 %s10, 1
        %s128 = sand.u32 %s37, 1
        %s129 = scalar_lea.sflag [#allocation3], %s128
        %s130 = sand.u32 %s37, 1
        %s131 = smul.addr %s130, 64
        %s132 = scalar_lea.vmem [#allocation2], %s131
        // Predicated region
        $region25: #{tpu_custom_call.1} parent=23 // pred_check
          %p133 = pneg %p50
        $region26: #{tpu_custom_call.1} parent=23 // pred_check_branch
          %135 = sbr.rel (%p133) target = $region28
        $region27: #{tpu_custom_call.1} parent=23 // pred_region
          %136 = dma.done %s129, 1024
        $region28: #{tpu_custom_call.1} parent=23 // pred_fallthru
          _
        %s137 = sand.u32 %s37, 1
        %s138 = scalar_lea.sflag [#allocation3], %s137
        %s139 = sand.u32 %s37, 1
        %s140 = smul.addr %s139, 64
        %s141 = scalar_lea.vmem [#allocation2], %s140
        %p142 = pneg %p50
        %p143 = pneg %p47
        %p144 = pneg %p78
        %p145 = pneg %p75
        %s146 = smul.u32 4, %s20
        %p147 = scmp.lt.s32.totalorder %s19, 1
        %s148 = scalar_select %p147, %s19, 1
        %p149 = scmp.lt.s32.totalorder %s146, 3
        %s150 = scalar_select %p149, %s146, 3
        %s151 = smul.addr %s150, 2
        %s152 = smul.addr %s148, 8
        %s153 = sadd.s32 %s151, %s152
        %s154 = smul.addr %s153, 8
        %s155 = scalar_lea.vmem %s1, %s154
        %s156 = smul.u32 4, %s20
        %s157 = smul.u32 4, %s20
        %p158 = scmp.lt.s32.totalorder %s19, 1
        %s159 = scalar_select %p158, %s19, 1
        %p160 = scmp.lt.s32.totalorder %s157, 3
        %s161 = scalar_select %p160, %s157, 3
        %s162 = smul.addr %s161, 2
        %s163 = smul.addr %s159, 8
        %s164 = sadd.s32 %s162, %s163
        %s165 = smul.addr %s164, 8
        %s166 = scalar_lea.vmem %s1, %s165
        %s167 = smul.u32 4, %s20
        %v168 = vld [vmem:[%s132 + $0x1] sm:$0xff]
        %v169 = vld [vmem:[%s132 + $0x9] sm:$0x3f]
        %v170 = vld [vmem:[%s132 + $0x11] sm:$0xff]
        %v171 = vld [vmem:[%s132 + $0x19] sm:$0x3f]
        %v172 = vld [vmem:[%s132 + $0x21] sm:$0xff]
        %v173 = vld [vmem:[%s132 + $0x29] sm:$0x3f]
        %v174 = vld [vmem:[%s132 + $0x31] sm:$0xff]
        %v175 = vld [vmem:[%s132 + $0x39] sm:$0x3f]
        %vm176 = vcmask 23552
        %177 = vst.msk [vmem:[%s166] sm:$0xff] %vm176, %v168
        %vm178 = vcmask 21504
        %179 = vst.msk [vmem:[%s166 + $0x8] sm:$0x3f] %vm178, %v169
        %180 = vst.msk [vmem:[%s166 + $0x10] sm:$0xff] %vm176, %v170
        %181 = vst.msk [vmem:[%s166 + $0x18] sm:$0x3f] %vm178, %v171
        %182 = vst.msk [vmem:[%s166 + $0x20] sm:$0xff] %vm176, %v172
        %183 = vst.msk [vmem:[%s166 + $0x28] sm:$0x3f] %vm178, %v173
        %184 = vst.msk [vmem:[%s166 + $0x30] sm:$0xff] %vm176, %v174
        %185 = vst.msk [vmem:[%s166 + $0x38] sm:$0x3f] %vm178, %v175
        %s186 = smul.u32 4, %s20
        %p187 = scmp.lt.s32.totalorder %s19, 1
        %s188 = scalar_select %p187, %s19, 1
        %p189 = scmp.lt.s32.totalorder %s186, 3
        %s190 = scalar_select %p189, %s186, 3
        %s191 = smul.addr %s190, 2
        %s192 = smul.addr %s188, 8
        %s193 = sadd.s32 %s191, %s192
        %s194 = smul.addr %s193, 8
        %s195 = scalar_lea.vmem %s1, %s194
        // Predicated region
        $region29: #{tpu_custom_call.1} parent=23 // pred_check
          %p196 = pneg %p75
        $region30: #{tpu_custom_call.1} parent=23 // pred_check_branch
          %198 = sbr.rel (%p196) target = $region32
        $region31: #{tpu_custom_call.1} parent=23 // pred_region
          %s199 = smul.u32 4, %s20
        $region32: #{tpu_custom_call.1} parent=23 // pred_fallthru
          _
      $region24: #{tpu_custom_call.1} parent=5 // pred_fallthru
        _
      %p200 = scmp.le.s32.totalorder 2, %s10
      // Predicated region
      $region33: #{tpu_custom_call.1} parent=5 // pred_check
        %p201 = pneg %p200
      $region34: #{tpu_custom_call.1} parent=5 // pred_check_branch
        %203 = sbr.rel (%p201) target = $region36
      $region35: #{tpu_custom_call.1} parent=5 // pred_region
        %s204 = ssub.s32 %s10, 2
        // Predicated region
        $region37: #{tpu_custom_call.1} parent=35 // pred_check
          %p205 = pneg %p81
        $region38: #{tpu_custom_call.1} parent=35 // pred_check_branch
          %207 = sbr.rel (%p205) target = $region40
        $region39: #{tpu_custom_call.1} parent=35 // pred_region
          %s208 = smul.u32 4, %s22
          %p209 = scmp.lt.s32.totalorder %s21, 1
          %s210 = scalar_select %p209, %s21, 1
          %p211 = scmp.lt.s32.totalorder %s208, 3
          %s212 = scalar_select %p211, %s208, 3
          %s213 = smul.addr %s212, 2
          %s214 = smul.addr %s210, 8
          %s215 = sadd.s32 %s213, %s214
          %s216 = smul.addr %s215, 8
          %s217 = scalar_lea.vmem %s1, %s216
        $region40: #{tpu_custom_call.1} parent=35 // pred_fallthru
          _
      $region36: #{tpu_custom_call.1} parent=5 // pred_fallthru
        _
    $region6: #{tpu_custom_call.1} parent=1 // loop_footer
      %s14 = sadd.s32 1, %s10
    $region7: #{tpu_custom_call.1} parent=1 // loop_footer_branch
      %9 = sbr.rel target = $region3
    $region8: #{tpu_custom_call.1} parent=1 // loop_exit
      _
    %218 = vsyncpa [#allocation3], 1
    %s219 = scalar_lea.sflag [#allocation3], 1
    %220 = vsyncpa %s219, 1

</llo_original>
